<compile_context>
chip_gen: v6e
topology: v6e:2x2x1
jax: 0.10.0
libtpu: 0.0.40
codegen_flags: <defaults>
</compile_context>

<pallas_src>
import jax
import jax.numpy as jnp
from jax.experimental import pallas as pl
from jax.experimental.pallas import tpu as pltpu


_VMEM_LIMIT = 48 * 1024 * 1024      # <= v7x 64 MiB physical; plenty on v5e/v6e
_K_COLLAPSE_MAX = 4096              # collapse K grid axis when H <= this


# ----------------------------- helpers ------------------------------------ #

def _round_up(n, m):
    return ((n + m - 1) // m) * m


def _tile(dim, preferred, align):
    """Largest multiple of `align` <= max(preferred, align) that covers dim."""
    t = min(preferred, _round_up(dim, align))
    return max(align, (t // align) * align)


def _sigmoid(z):
    # sigmoid(z) = 0.5 * (tanh(z/2) + 1): one EUP op, no VPU divide.
    return 0.5 * (jnp.tanh(0.5 * z) + 1.0)


def _dot_xt_w(x_tile, w_tile):
    # x_tile: (tm, tk), w_tile: (tn, tk)  (torch Linear weight layout).
    # Contract dim 1 of both => x @ W^T, no host-side transpose of W.
    return jax.lax.dot_general(
        x_tile, w_tile,
        dimension_numbers=(((1,), (1,)), ((), ())),
        preferred_element_type=jnp.float32)


def _masked_sq(diff, i, j, tm, tn, B, H, mask_rows, mask_cols):
    """(y_pred - y)^2 with padded rows/cols zeroed; mask code emitted only if needed."""
    sq = diff * diff
    if mask_rows:
        row = i * tm + jax.lax.broadcasted_iota(jnp.int32, (tm, tn), 0)
        sq = jnp.where(row < B, sq, 0.0)
    if mask_cols:
        col = j * tn + jax.lax.broadcasted_iota(jnp.int32, (tm, tn), 1)
        sq = jnp.where(col < H, sq, 0.0)
    return sq


# ----------------------------- kernels ------------------------------------ #

def _predict_kernel_fused(x_ref, w_ref, out_ref):
    # Collapsed-K path: one dot + sigmoid + lane-dense store per grid step.
    out_ref[...] = _sigmoid(_dot_xt_w(x_ref[...], w_ref[...])).astype(out_ref.dtype)


def _predict_kernel_kgrid(x_ref, w_ref, out_ref, acc_ref):
    # Large-H fallback: standard K-accumulation with f32 VMEM scratch.
    k = pl.program_id(2)

    @pl.when(k == 0)
    def _():
        acc_ref[...] = jnp.zeros_like(acc_ref)

    acc_ref[...] += _dot_xt_w(x_ref[...], w_ref[...])

    @pl.when(k == pl.num_programs(2) - 1)
    def _():
        out_ref[...] = _sigmoid(acc_ref[...]).astype(out_ref.dtype)


def _make_loss_kernel_fused(B, H, tm, tn, mask_rows, mask_cols):
    def kernel(x_ref, w_ref, y_ref, part_ref):
        i = pl.program_id(0)
        j = pl.program_id(1)
        y_pred = _sigmoid(_dot_xt_w(x_ref[...], w_ref[...]))
        diff = y_pred - y_ref[...].astype(jnp.float32)
        sq = _masked_sq(diff, i, j, tm, tn, B, H, mask_rows, mask_cols)
        # Per-(i, j)-tile lane-dense partial sums; each grid step owns its own
        # output block, so the grid can run fully parallel (v7x 2 TCs).
        part_ref[...] = jnp.sum(sq, axis=0, keepdims=True).reshape(1, 1, 1, tn)
    return kernel


def _make_loss_kernel_kgrid(B, H, tm, tn, mask_rows, mask_cols):
    def kernel(x_ref, w_ref, y_ref, part_ref, acc_ref):
        i = pl.program_id(0)
        j = pl.program_id(1)
        k = pl.program_id(2)

        @pl.when(k == 0)
        def _():
            acc_ref[...] = jnp.zeros_like(acc_ref)

        acc_ref[...] += _dot_xt_w(x_ref[...], w_ref[...])

        @pl.when(k == pl.num_programs(2) - 1)
        def _():
            y_pred = _sigmoid(acc_ref[...])
            diff = y_pred - y_ref[...].astype(jnp.float32)
            sq = _masked_sq(diff, i, j, tm, tn, B, H, mask_rows, mask_cols)
            part_ref[...] = jnp.sum(sq, axis=0, keepdims=True).reshape(1, 1, 1, tn)
    return kernel


# ----------------------------- wrapper ------------------------------------ #

def torch_model_forward(x, w, y=None, *, block_k=None):
    """Forward pass of TorchModel. Returns y_pred if y is None else scalar MSE loss.

    x: (B, H) f32, w: (H, H) f32 (torch Linear layout: rows = output features).
    block_k: optional explicit K tile (forces the K-grid path; mainly for testing).
    """
    B, H = x.shape
    assert w.shape == (H, H)

    # ---- tile selection -------------------------------------------------- #
    # tm stays ~= batch (padding rows is wasted MXU work; the kernel is W-BW bound).
    tm = _tile(B, 128, 8)
    Bp = _round_up(B, tm)
    gi = Bp // tm

    if H < 128:
        tn = H                      # full feature dim: no W/N padding at all
    else:
        tn = _tile(H, 512, 128)     # big lane-dense W tiles (HBM streaming)
    Hn = _round_up(H, tn)
    gj = Hn // tn

    collapse_k = (block_k is None) and (H <= _K_COLLAPSE_MAX)
    if collapse_k:
        tk, Hk, nk = H, H, 1        # contraction dim never padded here
    else:
        tk = _tile(H, block_k if block_k is not None else 1024, 128)
        Hk = _round_up(H, tk)
        nk = Hk // tk

    mask_rows = Bp != B
    mask_cols = Hn != H

    # ---- padding (only when actually required) --------------------------- #
    xp = x if (Bp == B and Hk == H) else jnp.pad(x, ((0, Bp - B), (0, Hk - H)))
    wp = w if (Hn == H and Hk == H) else jnp.pad(w, ((0, Hn - H), (0, Hk - H)))

    # ---- specs ------------------------------------------------------------ #
    if collapse_k:
        grid = (gi, gj)
        x_spec = pl.BlockSpec((tm, Hk), lambda i, j: (i, 0))   # DMA'd once per i
        w_spec = pl.BlockSpec((tn, Hk), lambda i, j: (j, 0))   # pure W streaming
        o_spec = pl.BlockSpec((tm, tn), lambda i, j: (i, j))
        y_spec = pl.BlockSpec((tm, tn), lambda i, j: (i, j))
        p_spec = pl.BlockSpec((1, 1, 1, tn), lambda i, j: (i, j, 0, 0))
        dims = ("parallel", "parallel")
        scratch = []
    else:
        grid = (gi, gj, nk)
        x_spec = pl.BlockSpec((tm, tk), lambda i, j, k: (i, k))
        w_spec = pl.BlockSpec((tn, tk), lambda i, j, k: (j, k))
        o_spec = pl.BlockSpec((tm, tn), lambda i, j, k: (i, j))
        y_spec = pl.BlockSpec((tm, tn), lambda i, j, k: (i, j))
        p_spec = pl.BlockSpec((1, 1, 1, tn), lambda i, j, k: (i, j, 0, 0))
        dims = ("parallel", "parallel", "arbitrary")
        scratch = [pltpu.VMEM((tm, tn), jnp.float32)]

    flops = 2 * Bp * Hn * Hk
    w_bytes = 4 * gi * Hn * Hk      # W is re-read once per i-tile

    if y is None:
        cost = pl.CostEstimate(
            flops=flops,
            transcendentals=Bp * Hn,
            bytes_accessed=w_bytes + 4 * (Bp * Hk + Bp * Hn))
        kernel = _predict_kernel_fused if collapse_k else _predict_kernel_kgrid
        out = pl.pallas_call(
            kernel,
            out_shape=jax.ShapeDtypeStruct((Bp, Hn), jnp.float32),
            grid_spec=pltpu.PrefetchScalarGridSpec(
                num_scalar_prefetch=0,
                grid=grid,
                in_specs=[x_spec, w_spec],
                out_specs=o_spec,
                scratch_shapes=scratch),
            compiler_params=pltpu.CompilerParams(
                dimension_semantics=dims,
                vmem_limit_bytes=_VMEM_LIMIT),
            cost_estimate=cost,
        )(xp, wp)
        if Bp != B or Hn != H:
            out = out[:B, :H]
        return out

    yp = y if (Bp == B and Hn == H) else jnp.pad(y, ((0, Bp - B), (0, Hn - H)))
    make = _make_loss_kernel_fused if collapse_k else _make_loss_kernel_kgrid
    kernel = make(B, H, tm, tn, mask_rows, mask_cols)
    cost = pl.CostEstimate(
        flops=flops + 3 * Bp * Hn,
        transcendentals=Bp * Hn,
        bytes_accessed=w_bytes + 4 * (Bp * Hk + 2 * Bp * Hn))
    parts = pl.pallas_call(
        kernel,
        out_shape=jax.ShapeDtypeStruct((gi, gj, 1, tn), jnp.float32),
        grid_spec=pltpu.PrefetchScalarGridSpec(
            num_scalar_prefetch=0,
            grid=grid,
            in_specs=[x_spec, w_spec, y_spec],
            out_specs=p_spec,
            scratch_shapes=scratch),
        compiler_params=pltpu.CompilerParams(
            dimension_semantics=dims,
            vmem_limit_bytes=_VMEM_LIMIT),
        cost_estimate=cost,
    )(xp, wp, yp)
    # Tiny final reduction of the per-tile partial sums; mean over true B*H.
    return jnp.sum(parts) * jnp.float32(1.0 / (B * H))


# ------------------------------- demo -------------------------------------- #

if __name__ == "__main__":
    key = jax.random.PRNGKey(0)
    kx, ky, kw, kx2, ky2, kw2 = jax.random.split(key, 6)

    # Small shapes consistent with the module: Linear(hidden, hidden), batched input.
    batch, hidden = 2, 32
    x = jax.random.normal(kx, (batch, hidden), dtype=jnp.float32)
    y = jax.random.uniform(ky, (batch, hidden), dtype=jnp.float32)
    bound = 1.0 / jnp.sqrt(hidden)
    w = jax.random.uniform(kw, (hidden, hidden), dtype=jnp.float32,
                           minval=-bound, maxval=bound)

    # Inference path (y=None): sigmoid(x @ W^T); training path: scalar MSE loss.
    y_pred = jax.block_until_ready(torch_model_forward(x, w))
    loss = jax.block_until_ready(torch_model_forward(x, w, y))

    ref_pred = jax.nn.sigmoid(x @ w.T)
    ref_loss = jnp.mean((ref_pred - y) ** 2)
    assert y_pred.shape == (batch, hidden)
    assert jnp.allclose(y_pred, ref_pred, atol=1e-5), "y_pred mismatch"
    assert jnp.allclose(loss, ref_loss, atol=1e-5), "loss mismatch"

    # Multi-N-tile shape: exercises the collapsed-K path with several W tiles
    # and the per-tile partial-sum loss reduction.
    b2, h2 = 8, 1024
    x2 = jax.random.normal(kx2, (b2, h2), dtype=jnp.float32)
    y2 = jax.random.uniform(ky2, (b2, h2), dtype=jnp.float32)
    bnd2 = 1.0 / jnp.sqrt(h2)
    w2 = jax.random.uniform(kw2, (h2, h2), dtype=jnp.float32,
                            minval=-bnd2, maxval=bnd2)
    rp2 = jax.nn.sigmoid(x2 @ w2.T)
    rl2 = jnp.mean((rp2 - y2) ** 2)

    yp2 = jax.block_until_ready(torch_model_forward(x2, w2))
    l2 = jax.block_until_ready(torch_model_forward(x2, w2, y2))
    assert jnp.allclose(yp2, rp2, atol=1e-4), "y_pred mismatch (collapsed-K)"
    assert jnp.allclose(l2, rl2, atol=1e-5), "loss mismatch (collapsed-K)"

    # Same shape through the K-grid fallback path (forced with block_k=256) to
    # validate the accumulator / epilogue code used for very large hidden sizes.
    yp3 = jax.block_until_ready(torch_model_forward(x2, w2, block_k=256))
    l3 = jax.block_until_ready(torch_model_forward(x2, w2, y2, block_k=256))
    assert jnp.allclose(yp3, rp2, atol=1e-4), "y_pred mismatch (K-grid)"
    assert jnp.allclose(l3, rl2, atol=1e-5), "loss mismatch (K-grid)"

    print("KERNEL_OK")
</pallas_src>

<mosaic_0001>
module attributes {stable_mosaic.version = 11 : i64} {
  func.func @_predict_kernel_fused(%arg0: i32, %arg1: i32, %arg2: memref<8x32xf32, #tpu.memory_space<vmem>>, %arg3: memref<32x32xf32, #tpu.memory_space<vmem>>, %arg4: memref<8x32xf32, #tpu.memory_space<vmem>>) attributes {dimension_semantics = [#tpu.dimension_semantics<parallel>, #tpu.dimension_semantics<parallel>], iteration_bounds = array<i64: 1, 1>, scalar_prefetch = 0 : i64, scratch_operands = 0 : i64, tpu.core_type = #tpu.core_type<tc>, window_params = [{transform_indices = @transform_0, window_bounds = array<i64: 8, 32>}, {transform_indices = @transform_1, window_bounds = array<i64: 32, 32>}, {transform_indices = @transform_2, window_bounds = array<i64: 8, 32>}]} {
    %c0 = arith.constant 0 : index
    %c0_0 = arith.constant 0 : index
    %0 = vector.load %arg2[%c0, %c0_0] : memref<8x32xf32, #tpu.memory_space<vmem>>, vector<8x32xf32>
    %c0_1 = arith.constant 0 : index
    %c0_2 = arith.constant 0 : index
    %1 = vector.load %arg3[%c0_1, %c0_2] : memref<32x32xf32, #tpu.memory_space<vmem>>, vector<32x32xf32>
    %cst = arith.constant dense<0.000000e+00> : vector<8x32xf32>
    %2 = tpu.matmul %0, %1, %cst {dimension_numbers = #tpu.dot_dimension_numbers<[1], [1], [0], [0], [0, 0, 1, 0], [], []>} : vector<8x32xf32>, vector<32x32xf32>, vector<8x32xf32> -> vector<8x32xf32>
    %cst_3 = arith.constant 5.000000e-01 : f32
    %3 = vector.broadcast %cst_3 : f32 to vector<8x32xf32>
    %4 = arith.mulf %3, %2 : vector<8x32xf32>
    %5 = math.tanh %4 : vector<8x32xf32>
    %cst_4 = arith.constant 1.000000e+00 : f32
    %6 = vector.broadcast %cst_4 : f32 to vector<8x32xf32>
    %7 = arith.addf %5, %6 : vector<8x32xf32>
    %cst_5 = arith.constant 5.000000e-01 : f32
    %8 = vector.broadcast %cst_5 : f32 to vector<8x32xf32>
    %9 = arith.mulf %8, %7 : vector<8x32xf32>
    %c0_6 = arith.constant 0 : index
    %c0_7 = arith.constant 0 : index
    %10 = vector.load %arg4[%c0_6, %c0_7] : memref<8x32xf32, #tpu.memory_space<vmem>>, vector<8x32xf32>
    tpu.vector_store %arg4[%c0_6, %c0_7], %9 {strides = array<i32>} : memref<8x32xf32, #tpu.memory_space<vmem>>, vector<8x32xf32>,
    return
  }
  func.func @transform_0(%arg0: i32, %arg1: i32) -> (i32, i32) {
    %c0_i32 = arith.constant 0 : i32
    %c0_i32_0 = arith.constant 0 : i32
    return %arg0, %c0_i32 : i32, i32
  }
  func.func @transform_1(%arg0: i32, %arg1: i32) -> (i32, i32) {
    %c0_i32 = arith.constant 0 : i32
    %c0_i32_0 = arith.constant 0 : i32
    return %arg1, %c0_i32 : i32, i32
  }
  func.func @transform_2(%arg0: i32, %arg1: i32) -> (i32, i32) {
    %c0_i32 = arith.constant 0 : i32
    return %arg0, %arg1 : i32, i32
  }
}

</mosaic_0001>

<llo_original>
// kernel: tpu_custom_call.1
$region0: #{tpu_custom_call.1}
  #allocation0 [shape = 'u32[]', space=smem, size = 0x4, offset = 0x4, fixed_abs, tag = 'smem constant byte address 0x4 - core index']
  #allocation1 [shape = 'u32[144,128]{1,0:T(1,128)}', space=vmem, size = 0x12000, scoped, tag = 'internal scratch']
  %s0 = inlined_call_operand.hbm [shape: f32[8,32], index: 0, kind: input, shape index: {}]
  %s1 = inlined_call_operand.hbm [shape: f32[32,32], index: 1, kind: input, shape index: {}]
  %s2 = inlined_call_operand.hbm [shape: f32[8,32], index: 2, kind: output, shape index: {}]
  %s3 = sld [smem:[#allocation0]]
  $region26: #{tpu_custom_call.1} parent=0
    _
  %s5 = ssub.s32 1, %s3
  %s6 = scalar_select 0, %s5, %s3
  $region1: #{tpu_custom_call.1} parent=0
    #allocation2 [shape = 'u8[4096]{0}', space=vmem, size = 0x1000, scoped, tag = 'input window, operand 0, single buffered']
    #allocation3 [shape = 's32[1]{0}', space=sflag, size = 0x4, scoped, tag = 'scoped memory for tpu_custom_call.1']
    #allocation4 [shape = 's32[1]{0}', space=sflag, size = 0x4, scoped, tag = 'scoped memory for tpu_custom_call.1']
    #allocation5 [shape = 'u8[16384]{0}', space=vmem, size = 0x4000, scoped, tag = 'input window, operand 1, single buffered']
    #allocation6 [shape = 's32[1]{0}', space=sflag, size = 0x4, scoped, tag = 'scoped memory for tpu_custom_call.1']
    #allocation7 [shape = 'u8[4096]{0}', space=vmem, size = 0x1000, scoped, tag = 'output window, operand 0, single buffered']
    %7 = vsyncpa [#allocation3], 0
    %8 = vsyncpa [#allocation6], 0
    %9 = vsyncpa [#allocation4], 0
    // Predicated region
    $region2: #{tpu_custom_call.1} parent=1 // pred_check
      _
    $region3: #{tpu_custom_call.1} parent=1 // pred_check_branch
      %11 = sbr.rel (0) target = $region5
    $region4: #{tpu_custom_call.1} parent=1 // pred_region
      %s13 = ssub.s32 128, 128
      %14 = vsyncadd [#allocation3], %s13
      %s16 = sshll.u32 [#allocation2], 4
      %s17 = int_to_ptr.vmem [resolvable:$true] %s16
      %19 = dma.hbm_to_vmem [thread:$0]  %s0, 128, %s17, [#allocation3]
    $region5: #{tpu_custom_call.1} parent=1 // pred_fallthru
      _
    // Predicated region
    $region6: #{tpu_custom_call.1} parent=1 // pred_check
      _
    $region7: #{tpu_custom_call.1} parent=1 // pred_check_branch
      %21 = sbr.rel (0) target = $region9
    $region8: #{tpu_custom_call.1} parent=1 // pred_region
      %s23 = ssub.s32 512, 512
      %24 = vsyncadd [#allocation6], %s23
      %s25 = sshll.u32 [#allocation5], 4
      %s26 = int_to_ptr.vmem [resolvable:$true] %s25
      %31 = dma.hbm_to_vmem [thread:$0]  %s1, 512, %s26, [#allocation6], 128, 128, 8
    $region9: #{tpu_custom_call.1} parent=1 // pred_fallthru
      _
    // Predicated region
    $region10: #{tpu_custom_call.1} parent=1 // pred_check
      _
    $region11: #{tpu_custom_call.1} parent=1 // pred_check_branch
      %33 = sbr.rel (0) target = $region13
    $region12: #{tpu_custom_call.1} parent=1 // pred_region
      %34 = dma.done [#allocation3], 128
    $region13: #{tpu_custom_call.1} parent=1 // pred_fallthru
      _
    // Predicated region
    $region14: #{tpu_custom_call.1} parent=1 // pred_check
      _
    $region15: #{tpu_custom_call.1} parent=1 // pred_check_branch
      %36 = sbr.rel (0) target = $region17
    $region16: #{tpu_custom_call.1} parent=1 // pred_region
      %37 = dma.done [#allocation6], 512
    $region17: #{tpu_custom_call.1} parent=1 // pred_fallthru
      _
    %v38 = vld [vmem:[#allocation2] sm:$0xff]
    %v39 = vld [vmem:[#allocation5] sm:$0xff]
    %v40 = vld [vmem:[#allocation5 + $0x8] sm:$0xff]
    %v41 = vld [vmem:[#allocation5 + $0x10] sm:$0xff]
    %v42 = vld [vmem:[#allocation5 + $0x18] sm:$0xff]
    %vm43 = vcmask 261120
    %v45 = vsel %vm43, %v38, 0
    %v48 = vsel %vm43, %v39, 0
    %v51 = vsel %vm43, %v40, 0
    %v54 = vsel %vm43, %v41, 0
    %v57 = vsel %vm43, %v42, 0
    %59 = vmatprep.subr.mxu0 0.0
    %60 = vmatpush1.xpose.msra.mxu0 0.0
    %61 = vmatprep.subr.mxu0 0.0
    %62 = vmatpush1.xpose.msra.mxu0 0.0
    %63 = vmatprep.subr.mxu0 0.0
    %64 = vmatpush1.xpose.msra.mxu0 0.0
    %65 = vmatprep.subr.mxu0 0.0
    %66 = vmatpush1.xpose.msra.mxu0 0.0
    %67 = vmatprep.subr.mxu0 0.0
    %68 = vmatpush1.xpose.msra.mxu0 0.0
    %69 = vmatprep.subr.mxu0 0.0
    %70 = vmatpush1.xpose.msra.mxu0 0.0
    %71 = vmatprep.subr.mxu0 0.0
    %72 = vmatpush1.xpose.msra.mxu0 0.0
    %73 = vmatprep.subr.mxu0 0.0
    %74 = vmatpush1.xpose.msra.mxu0 0.0
    %75 = vmatprep.subr.mxu0 0.0
    %76 = vmatpush1.xpose.msra.mxu0 0.0
    %77 = vmatprep.subr.mxu0 0.0
    %78 = vmatpush1.xpose.msra.mxu0 0.0
    %79 = vmatprep.subr.mxu0 0.0
    %80 = vmatpush1.xpose.msra.mxu0 0.0
    %81 = vmatprep.subr.mxu0 0.0
    %82 = vmatpush1.xpose.msra.mxu0 0.0
    %83 = vmatprep.subr.mxu0 0.0
    %84 = vmatpush1.xpose.msra.mxu0 %v57
    %85 = vmatprep.subr.mxu0 0.0
    %86 = vmatpush1.xpose.msra.mxu0 %v54
    %87 = vmatprep.subr.mxu0 0.0
    %88 = vmatpush1.xpose.msra.mxu0 %v51
    %89 = vmatprep.subr.mxu0 0.0
    %90 = vmatpush1.xpose.msra.mxu0 %v48
    %91 = vmatprep.subr.mxu0 0.0
    %92 = vmatpush2.xpose.msra.mxu0 0.0
    %93 = vmatprep.subr.mxu0 0.0
    %94 = vmatpush2.xpose.msra.mxu0 0.0
    %95 = vmatprep.subr.mxu0 0.0
    %96 = vmatpush2.xpose.msra.mxu0 0.0
    %97 = vmatprep.subr.mxu0 0.0
    %98 = vmatpush2.xpose.msra.mxu0 0.0
    %99 = vmatprep.subr.mxu0 0.0
    %100 = vmatpush2.xpose.msra.mxu0 0.0
    %101 = vmatprep.subr.mxu0 0.0
    %102 = vmatpush2.xpose.msra.mxu0 0.0
    %103 = vmatprep.subr.mxu0 0.0
    %104 = vmatpush2.xpose.msra.mxu0 0.0
    %105 = vmatprep.subr.mxu0 0.0
    %106 = vmatpush2.xpose.msra.mxu0 0.0
    %107 = vmatprep.subr.mxu0 0.0
    %108 = vmatpush2.xpose.msra.mxu0 0.0
    %109 = vmatprep.subr.mxu0 0.0
    %110 = vmatpush2.xpose.msra.mxu0 0.0
    %111 = vmatprep.subr.mxu0 0.0
    %112 = vmatpush2.xpose.msra.mxu0 0.0
    %113 = vmatprep.subr.mxu0 0.0
    %114 = vmatpush2.xpose.msra.mxu0 0.0
    %115 = vmatprep.subr.mxu0 0.0
    %116 = vmatpush2.xpose.msra.mxu0 0.0
    %117 = vmatprep.subr.mxu0 0.0
    %118 = vmatpush2.xpose.msra.mxu0 0.0
    %119 = vmatprep.subr.mxu0 0.0
    %120 = vmatpush2.xpose.msra.mxu0 0.0
    %121 = vmatprep.subr.mxu0 0.0
    %122 = vmatpush2.xpose.msra.mxu0 0.0
    %123 = vmatprep.mubr.f32.mxu0 0.0
    %124 = vmatmul.mubr.f32.gmra.mxu0 %v45
    %v125 = vpop.f32.mrf.mxu0
    %v126 = vadd.f32 0.0, %v125
    %v127 = vpop.f32.mrf.mxu0
    %128 = vdwg.mxu0
    %v129 = vmul.f32 %v126, 0.5
    %v130 = vtanh.pop %v129
    %v131 = vadd.f32 %v130, 1.0
    %v132 = vmul.f32 %v131, 0.5
    %133 = vst.msk [vmem:[#allocation7] sm:$0xff] %vm43, %v132
    // Predicated region
    $region18: #{tpu_custom_call.1} parent=1 // pred_check
      _
    $region19: #{tpu_custom_call.1} parent=1 // pred_check_branch
      %135 = sbr.rel (0) target = $region21
    $region20: #{tpu_custom_call.1} parent=1 // pred_region
      %s137 = ssub.s32 128, 128
      %138 = vsyncadd [#allocation4], %s137
      %s140 = sshll.u32 [#allocation7], 4
      %s141 = int_to_ptr.vmem [resolvable:$true] %s140
      %143 = dma.vmem_to_hbm [thread:$0]  %s141, 128, %s2, [#allocation4]
    $region21: #{tpu_custom_call.1} parent=1 // pred_fallthru
      _
    // Predicated region
    $region22: #{tpu_custom_call.1} parent=1 // pred_check
      _
    $region23: #{tpu_custom_call.1} parent=1 // pred_check_branch
      %145 = sbr.rel (0) target = $region25
    $region24: #{tpu_custom_call.1} parent=1 // pred_region
      %146 = dma.done [#allocation4], 128
    $region25: #{tpu_custom_call.1} parent=1 // pred_fallthru
      _
    %147 = vsyncpa [#allocation3], 1
    %148 = vsyncpa [#allocation6], 1
    %149 = vsyncpa [#allocation4], 1

</llo_original>
